<compile_context>
chip_gen: v7x
topology: tpu7x:2x2x1
jax: 0.10.0
libtpu: 0.0.40
codegen_flags: <defaults>
</compile_context>

<pallas_src>
import functools

import jax
import jax.numpy as jnp
from jax.experimental import pallas as pl
from jax.experimental.pallas import tpu as pltpu

EPS = 1e-5  # PyTorch BatchNorm default eps


# ---------------------------------------------------------------------------
# Fused kernel
# ---------------------------------------------------------------------------
def _eca_kernel(x_ref, w1_ref, b1_ref, w2_ref, b2_ref, bns_ref, bnb_ref,
                out_ref, sum_sc, max_sc, *, inv_hw):
    """Fused EnhancedChannelAttention forward.

    x_ref block: (1, C, t_hw) -- HW kept on the lane dimension.
    grid = (B, HW // t_hw); axis 0 parallel over batch, axis 1 is the spatial
    reduction with VMEM accumulators (sum, max).
    """
    hw_step = pl.program_id(1)

    @pl.when(hw_step == 0)
    def _init():
        sum_sc[...] = jnp.zeros_like(sum_sc)
        max_sc[...] = jnp.full_like(max_sc, -jnp.inf)

    x = x_ref[...]                                        # (1, C, t_hw) f32
    sum_sc[...] += jnp.sum(x, axis=-1)                    # (1, C)
    max_sc[...] = jnp.maximum(max_sc[...], jnp.max(x, axis=-1))

    @pl.when(hw_step == pl.num_programs(1) - 1)
    def _finalize():
        avg = sum_sc[...] * inv_hw                        # (1, C)
        mx = max_sc[...]                                  # (1, C)
        w1 = w1_ref[...]                                  # (C, hid_p)
        b1 = b1_ref[...]                                  # (1, hid_p)
        h_avg = jnp.maximum(
            jnp.dot(avg, w1, preferred_element_type=jnp.float32) + b1, 0.0)
        h_max = jnp.maximum(
            jnp.dot(mx, w1, preferred_element_type=jnp.float32) + b1, 0.0)
        # fc2(h_avg) + fc2(h_max) == (h_avg + h_max) @ w2 + 2 * b2
        o = jnp.dot(h_avg + h_max, w2_ref[...],
                    preferred_element_type=jnp.float32) + 2.0 * b2_ref[...]
        y = o * bns_ref[...] + bnb_ref[...]               # eval-mode BatchNorm1d
        # sigmoid: exp + approx reciprocal both ride the EUP slot
        sig = pl.reciprocal(1.0 + jnp.exp(-y), approx=True)
        out_ref[...] = sig.reshape(out_ref.shape)


# ---------------------------------------------------------------------------
# Wrapper
# ---------------------------------------------------------------------------
def _round_up(n, m):
    return ((n + m - 1) // m) * m


def _choose_hw_tile(hw, c, budget_bytes=4 << 20):
    """Largest lane-aligned spatial tile dividing HW that fits the VMEM budget
    (x block is double-buffered). Falls back to the full extent if HW is not a
    multiple of 128 (full-extent blocks are exempt from the 128-lane rule)."""
    if hw % 128 != 0:
        return hw
    best = 128
    for cand in range(128, hw + 1, 128):
        if hw % cand == 0 and 2 * c * cand * 4 <= budget_bytes:
            best = cand
    return best


def enhanced_channel_attention(x_nchw, params):
    """x_nchw: (B, C, H, W) float32 (PyTorch NCHW). Returns (B, C, 1, 1)."""
    B, C, H, W = x_nchw.shape
    HW = H * W
    x = x_nchw.reshape(B, C, HW).astype(jnp.float32)      # free reshape, HW on lanes

    fc1_w, fc1_b = params["fc1_w"], params["fc1_b"]       # (hid, C), (hid,)
    fc2_w, fc2_b = params["fc2_w"], params["fc2_b"]       # (C, hid), (C,)
    gamma, beta, mean, var = params["bn"]
    hid = fc1_w.shape[0]
    hid_p = _round_up(hid, 128)                           # exact zero-padding of hidden dim

    # Fold eval-mode BN into per-channel scale/bias.
    # TODO(synk): training-mode BatchNorm1d (batch statistics + running-stat update)
    # is out of scope for this inference forward kernel.
    bn_s = gamma / jnp.sqrt(var + EPS)
    bn_b = beta - bn_s * mean

    # Lane-padded MLP parameters (padding is semantically exact: ReLU(0)=0 and
    # zero rows of w2 contribute nothing).
    w1 = jnp.zeros((C, hid_p), jnp.float32).at[:, :hid].set(
        jnp.transpose(fc1_w).astype(jnp.float32))
    b1 = jnp.zeros((1, hid_p), jnp.float32).at[0, :hid].set(
        fc1_b.astype(jnp.float32))
    w2 = jnp.zeros((hid_p, C), jnp.float32).at[:hid, :].set(
        jnp.transpose(fc2_w).astype(jnp.float32))
    b2 = fc2_b.reshape(1, C).astype(jnp.float32)

    t_hw = _choose_hw_tile(HW, C)
    grid = (B, HW // t_hw)

    out = pl.pallas_call(
        functools.partial(_eca_kernel, inv_hw=1.0 / HW),
        out_shape=jax.ShapeDtypeStruct((B, 1, C), jnp.float32),
        grid_spec=pltpu.PrefetchScalarGridSpec(
            num_scalar_prefetch=0,
            grid=grid,
            in_specs=[
                pl.BlockSpec((1, C, t_hw), lambda b, h: (b, 0, h)),   # x
                pl.BlockSpec((C, hid_p), lambda b, h: (0, 0)),        # fc1 weight (padded)
                pl.BlockSpec((1, hid_p), lambda b, h: (0, 0)),        # fc1 bias (padded)
                pl.BlockSpec((hid_p, C), lambda b, h: (0, 0)),        # fc2 weight (padded)
                pl.BlockSpec((1, C), lambda b, h: (0, 0)),            # fc2 bias
                pl.BlockSpec((1, C), lambda b, h: (0, 0)),            # bn scale
                pl.BlockSpec((1, C), lambda b, h: (0, 0)),            # bn bias
            ],
            out_specs=pl.BlockSpec((1, 1, C), lambda b, h: (b, 0, 0)),
            scratch_shapes=[pltpu.VMEM((1, C), jnp.float32),          # sum acc
                            pltpu.VMEM((1, C), jnp.float32)],         # max acc
        ),
        compiler_params=pltpu.CompilerParams(
            dimension_semantics=("parallel", "arbitrary"),
            vmem_limit_bytes=32 * 1024 * 1024,
        ),
    )(
        x,
        w1,
        b1,
        w2,
        b2,
        bn_s.reshape(1, C).astype(jnp.float32),
        bn_b.reshape(1, C).astype(jnp.float32),
    )
    return out.reshape(B, C, 1, 1)


# ---------------------------------------------------------------------------
# Pure-JAX reference (mirrors the PyTorch module, eval-mode BN) for validation
# ---------------------------------------------------------------------------
def enhanced_channel_attention_ref(x, params):
    b, c = x.shape[0], x.shape[1]
    avg = jnp.mean(x, axis=(2, 3))
    mx = jnp.max(x, axis=(2, 3))

    def mlp(v):
        h = jax.nn.relu(v @ params["fc1_w"].T + params["fc1_b"])
        return h @ params["fc2_w"].T + params["fc2_b"]

    out = mlp(avg) + mlp(mx)
    g, beta, m, v = params["bn"]
    out = (out - m) / jnp.sqrt(v + EPS) * g + beta
    return jax.nn.sigmoid(out).reshape(b, c, 1, 1)


# ---------------------------------------------------------------------------
# Deterministic parameter init (mirrors the PyTorch module's shapes)
# ---------------------------------------------------------------------------
def init_params(key, in_channels, reduction_ratio=16):
    hid = in_channels // reduction_ratio
    ks = jax.random.split(key, 8)
    return {
        "fc1_w": jax.random.normal(ks[0], (hid, in_channels), jnp.float32) * 0.2,
        "fc1_b": jax.random.normal(ks[1], (hid,), jnp.float32) * 0.1,
        "fc2_w": jax.random.normal(ks[2], (in_channels, hid), jnp.float32) * 0.2,
        "fc2_b": jax.random.normal(ks[3], (in_channels,), jnp.float32) * 0.1,
        "bn": (
            1.0 + 0.1 * jax.random.normal(ks[4], (in_channels,), jnp.float32),  # gamma
            0.1 * jax.random.normal(ks[5], (in_channels,), jnp.float32),        # beta
            0.1 * jax.random.normal(ks[6], (in_channels,), jnp.float32),        # running_mean
            0.5 + jax.random.uniform(ks[7], (in_channels,), jnp.float32),       # running_var
        ),
    }


# ---------------------------------------------------------------------------
if __name__ == "__main__":
    key = jax.random.PRNGKey(0)
    k_x, k_p = jax.random.split(key)

    # reduction_ratio=16 requires in_channels >= 16; use C=32 -> hidden=2
    B, C, H, W = 2, 32, 16, 16
    x = jax.random.normal(k_x, (B, C, H, W), jnp.float32)   # NCHW like PyTorch
    params = init_params(k_p, C, reduction_ratio=16)

    out = jax.block_until_ready(enhanced_channel_attention(x, params))
    ref = jax.block_until_ready(enhanced_channel_attention_ref(x, params))

    assert out.shape == (B, C, 1, 1), out.shape
    err = float(jnp.max(jnp.abs(out - ref)))
    assert err < 5e-3, f"mismatch: max abs err {err}"

    print("KERNEL_OK")
</pallas_src>

<mosaic_0001>
module attributes {stable_mosaic.version = 11 : i64} {
  func.func @_eca_kernel(%arg0: i32, %arg1: i32, %arg2: memref<1x32x256xf32, #tpu.memory_space<vmem>>, %arg3: memref<32x128xf32, #tpu.memory_space<vmem>>, %arg4: memref<1x128xf32, #tpu.memory_space<vmem>>, %arg5: memref<128x32xf32, #tpu.memory_space<vmem>>, %arg6: memref<1x32xf32, #tpu.memory_space<vmem>>, %arg7: memref<1x32xf32, #tpu.memory_space<vmem>>, %arg8: memref<1x32xf32, #tpu.memory_space<vmem>>, %arg9: memref<1x1x32xf32, #tpu.memory_space<vmem>>, %arg10: memref<1x32xf32, #tpu.memory_space<vmem>>, %arg11: memref<1x32xf32, #tpu.memory_space<vmem>>) attributes {dimension_semantics = [#tpu.dimension_semantics<parallel>, #tpu.dimension_semantics<arbitrary>], iteration_bounds = array<i64: 2, 1>, scalar_prefetch = 0 : i64, scratch_operands = 2 : i64, tpu.core_type = #tpu.core_type<tc>, window_params = [{transform_indices = @transform_0, window_bounds = array<i64: 1, 32, 256>}, {pipeline_mode = #tpu.pipeline_mode<synchronous>, transform_indices = @transform_1, window_bounds = array<i64: 32, 128>}, {pipeline_mode = #tpu.pipeline_mode<synchronous>, transform_indices = @transform_2, window_bounds = array<i64: 1, 128>}, {pipeline_mode = #tpu.pipeline_mode<synchronous>, transform_indices = @transform_3, window_bounds = array<i64: 128, 32>}, {pipeline_mode = #tpu.pipeline_mode<synchronous>, transform_indices = @transform_4, window_bounds = array<i64: 1, 32>}, {pipeline_mode = #tpu.pipeline_mode<synchronous>, transform_indices = @transform_5, window_bounds = array<i64: 1, 32>}, {pipeline_mode = #tpu.pipeline_mode<synchronous>, transform_indices = @transform_6, window_bounds = array<i64: 1, 32>}, {transform_indices = @transform_7, window_bounds = array<i64: 1, 1, 32>}]} {
    %c0_i32 = arith.constant 0 : i32
    %0 = arith.cmpi eq, %arg1, %c0_i32 : i32
    %1 = arith.extui %0 : i1 to i32
    %c0_i32_0 = arith.constant 0 : i32
    %2 = arith.cmpi ne, %1, %c0_i32_0 : i32
    scf.if %2 {
      %cst_14 = arith.constant 0.000000e+00 : f32
      %15 = vector.broadcast %cst_14 : f32 to vector<1x32xf32>
      %c0_15 = arith.constant 0 : index
      %c0_16 = arith.constant 0 : index
      %16 = vector.load %arg10[%c0_15, %c0_16] : memref<1x32xf32, #tpu.memory_space<vmem>>, vector<1x32xf32>
      tpu.vector_store %arg10[%c0_15, %c0_16], %15 {strides = array<i32>} : memref<1x32xf32, #tpu.memory_space<vmem>>, vector<1x32xf32>,
      %cst_17 = arith.constant 0xFF800000 : f32
      %17 = vector.broadcast %cst_17 : f32 to vector<1x32xf32>
      %c0_18 = arith.constant 0 : index
      %c0_19 = arith.constant 0 : index
      %18 = vector.load %arg11[%c0_18, %c0_19] : memref<1x32xf32, #tpu.memory_space<vmem>>, vector<1x32xf32>
      tpu.vector_store %arg11[%c0_18, %c0_19], %17 {strides = array<i32>} : memref<1x32xf32, #tpu.memory_space<vmem>>, vector<1x32xf32>,
    } else {
    }
    %c0 = arith.constant 0 : index
    %c0_1 = arith.constant 0 : index
    %c0_2 = arith.constant 0 : index
    %3 = vector.load %arg2[%c0, %c0_1, %c0_2] : memref<1x32x256xf32, #tpu.memory_space<vmem>>, vector<1x32x256xf32>
    %c0_3 = arith.constant 0 : index
    %c0_4 = arith.constant 0 : index
    %4 = vector.load %arg10[%c0_3, %c0_4] : memref<1x32xf32, #tpu.memory_space<vmem>>, vector<1x32xf32>
    %cst = arith.constant dense<0.000000e+00> : vector<1x32xf32>
    %5 = vector.multi_reduction <add>, %3, %cst [2] : vector<1x32x256xf32> to vector<1x32xf32>
    %6 = arith.addf %4, %5 : vector<1x32xf32>
    %c0_5 = arith.constant 0 : index
    %c0_6 = arith.constant 0 : index
    %7 = vector.load %arg10[%c0_5, %c0_6] : memref<1x32xf32, #tpu.memory_space<vmem>>, vector<1x32xf32>
    tpu.vector_store %arg10[%c0_5, %c0_6], %6 {strides = array<i32>} : memref<1x32xf32, #tpu.memory_space<vmem>>, vector<1x32xf32>,
    %c0_7 = arith.constant 0 : index
    %c0_8 = arith.constant 0 : index
    %8 = vector.load %arg11[%c0_7, %c0_8] : memref<1x32xf32, #tpu.memory_space<vmem>>, vector<1x32xf32>
    %cst_9 = arith.constant dense<0xFF800000> : vector<1x32xf32>
    %9 = vector.multi_reduction <maximumf>, %3, %cst_9 [2] : vector<1x32x256xf32> to vector<1x32xf32>
    %10 = arith.maximumf %8, %9 : vector<1x32xf32>
    %c0_10 = arith.constant 0 : index
    %c0_11 = arith.constant 0 : index
    %11 = vector.load %arg11[%c0_10, %c0_11] : memref<1x32xf32, #tpu.memory_space<vmem>>, vector<1x32xf32>
    tpu.vector_store %arg11[%c0_10, %c0_11], %10 {strides = array<i32>} : memref<1x32xf32, #tpu.memory_space<vmem>>, vector<1x32xf32>,
    %c0_i32_12 = arith.constant 0 : i32
    %12 = arith.cmpi eq, %arg1, %c0_i32_12 : i32
    %13 = arith.extui %12 : i1 to i32
    %c0_i32_13 = arith.constant 0 : i32
    %14 = arith.cmpi ne, %13, %c0_i32_13 : i32
    scf.if %14 {
      %c0_14 = arith.constant 0 : index
      %c0_15 = arith.constant 0 : index
      %15 = vector.load %arg10[%c0_14, %c0_15] : memref<1x32xf32, #tpu.memory_space<vmem>>, vector<1x32xf32>
      %cst_16 = arith.constant 3.906250e-03 : f32
      %16 = vector.broadcast %cst_16 : f32 to vector<1x32xf32>
      %17 = arith.mulf %15, %16 : vector<1x32xf32>
      %c0_17 = arith.constant 0 : index
      %c0_18 = arith.constant 0 : index
      %18 = vector.load %arg11[%c0_17, %c0_18] : memref<1x32xf32, #tpu.memory_space<vmem>>, vector<1x32xf32>
      %c0_19 = arith.constant 0 : index
      %c0_20 = arith.constant 0 : index
      %19 = vector.load %arg3[%c0_19, %c0_20] : memref<32x128xf32, #tpu.memory_space<vmem>>, vector<32x128xf32>
      %c0_21 = arith.constant 0 : index
      %c0_22 = arith.constant 0 : index
      %20 = vector.load %arg4[%c0_21, %c0_22] : memref<1x128xf32, #tpu.memory_space<vmem>>, vector<1x128xf32>
      %cst_23 = arith.constant dense<0.000000e+00> : vector<1x128xf32>
      %21 = tpu.matmul %17, %19, %cst_23 {dimension_numbers = #tpu.dot_dimension_numbers<[1], [0], [0], [1], [0, 0, 1, 1], [], []>} : vector<1x32xf32>, vector<32x128xf32>, vector<1x128xf32> -> vector<1x128xf32>
      %22 = arith.addf %21, %20 : vector<1x128xf32>
      %cst_24 = arith.constant 0.000000e+00 : f32
      %23 = vector.broadcast %cst_24 : f32 to vector<1x128xf32>
      %24 = arith.maximumf %22, %23 : vector<1x128xf32>
      %cst_25 = arith.constant dense<0.000000e+00> : vector<1x128xf32>
      %25 = tpu.matmul %18, %19, %cst_25 {dimension_numbers = #tpu.dot_dimension_numbers<[1], [0], [0], [1], [0, 0, 1, 1], [], []>} : vector<1x32xf32>, vector<32x128xf32>, vector<1x128xf32> -> vector<1x128xf32>
      %26 = arith.addf %25, %20 : vector<1x128xf32>
      %cst_26 = arith.constant 0.000000e+00 : f32
      %27 = vector.broadcast %cst_26 : f32 to vector<1x128xf32>
      %28 = arith.maximumf %26, %27 : vector<1x128xf32>
      %29 = arith.addf %24, %28 : vector<1x128xf32>
      %c0_27 = arith.constant 0 : index
      %c0_28 = arith.constant 0 : index
      %30 = vector.load %arg5[%c0_27, %c0_28] : memref<128x32xf32, #tpu.memory_space<vmem>>, vector<128x32xf32>
      %cst_29 = arith.constant dense<0.000000e+00> : vector<1x32xf32>
      %31 = tpu.matmul %29, %30, %cst_29 {dimension_numbers = #tpu.dot_dimension_numbers<[1], [0], [0], [1], [0, 0, 1, 1], [], []>} : vector<1x128xf32>, vector<128x32xf32>, vector<1x32xf32> -> vector<1x32xf32>
      %c0_30 = arith.constant 0 : index
      %c0_31 = arith.constant 0 : index
      %32 = vector.load %arg6[%c0_30, %c0_31] : memref<1x32xf32, #tpu.memory_space<vmem>>, vector<1x32xf32>
      %cst_32 = arith.constant 2.000000e+00 : f32
      %33 = vector.broadcast %cst_32 : f32 to vector<1x32xf32>
      %34 = arith.mulf %33, %32 : vector<1x32xf32>
      %35 = arith.addf %31, %34 : vector<1x32xf32>
      %c0_33 = arith.constant 0 : index
      %c0_34 = arith.constant 0 : index
      %36 = vector.load %arg7[%c0_33, %c0_34] : memref<1x32xf32, #tpu.memory_space<vmem>>, vector<1x32xf32>
      %37 = arith.mulf %35, %36 : vector<1x32xf32>
      %c0_35 = arith.constant 0 : index
      %c0_36 = arith.constant 0 : index
      %38 = vector.load %arg8[%c0_35, %c0_36] : memref<1x32xf32, #tpu.memory_space<vmem>>, vector<1x32xf32>
      %39 = arith.addf %37, %38 : vector<1x32xf32>
      %cst_37 = arith.constant 0.000000e+00 : f32
      %40 = vector.broadcast %cst_37 : f32 to vector<1x32xf32>
      %41 = arith.subf %40, %39 : vector<1x32xf32>
      %42 = math.exp %41 : vector<1x32xf32>
      %cst_38 = arith.constant 1.000000e+00 : f32
      %43 = vector.broadcast %cst_38 : f32 to vector<1x32xf32>
      %44 = arith.addf %43, %42 : vector<1x32xf32>
      %45 = tpu.reciprocal %44 {approx = true} : vector<1x32xf32> -> vector<1x32xf32>
      %46 = vector.shape_cast %45 : vector<1x32xf32> to vector<1x1x32xf32>
      %c0_39 = arith.constant 0 : index
      %c0_40 = arith.constant 0 : index
      %c0_41 = arith.constant 0 : index
      %47 = vector.load %arg9[%c0_39, %c0_40, %c0_41] : memref<1x1x32xf32, #tpu.memory_space<vmem>>, vector<1x1x32xf32>
      tpu.vector_store %arg9[%c0_39, %c0_40, %c0_41], %46 {strides = array<i32>} : memref<1x1x32xf32, #tpu.memory_space<vmem>>, vector<1x1x32xf32>,
    } else {
    }
    return
  }
  func.func @transform_0(%arg0: i32, %arg1: i32) -> (i32, i32, i32) {
    %c0_i32 = arith.constant 0 : i32
    %c0_i32_0 = arith.constant 0 : i32
    return %arg0, %c0_i32, %arg1 : i32, i32, i32
  }
  func.func @transform_1(%arg0: i32, %arg1: i32) -> (i32, i32) {
    %c0_i32 = arith.constant 0 : i32
    %c0_i32_0 = arith.constant 0 : i32
    %c0_i32_1 = arith.constant 0 : i32
    return %c0_i32, %c0_i32_0 : i32, i32
  }
  func.func @transform_2(%arg0: i32, %arg1: i32) -> (i32, i32) {
    %c0_i32 = arith.constant 0 : i32
    %c0_i32_0 = arith.constant 0 : i32
    %c0_i32_1 = arith.constant 0 : i32
    return %c0_i32, %c0_i32_0 : i32, i32
  }
  func.func @transform_3(%arg0: i32, %arg1: i32) -> (i32, i32) {
    %c0_i32 = arith.constant 0 : i32
    %c0_i32_0 = arith.constant 0 : i32
    %c0_i32_1 = arith.constant 0 : i32
    return %c0_i32, %c0_i32_0 : i32, i32
  }
  func.func @transform_4(%arg0: i32, %arg1: i32) -> (i32, i32) {
    %c0_i32 = arith.constant 0 : i32
    %c0_i32_0 = arith.constant 0 : i32
    %c0_i32_1 = arith.constant 0 : i32
    return %c0_i32, %c0_i32_0 : i32, i32
  }
  func.func @transform_5(%arg0: i32, %arg1: i32) -> (i32, i32) {
    %c0_i32 = arith.constant 0 : i32
    %c0_i32_0 = arith.constant 0 : i32
    %c0_i32_1 = arith.constant 0 : i32
    return %c0_i32, %c0_i32_0 : i32, i32
  }
  func.func @transform_6(%arg0: i32, %arg1: i32) -> (i32, i32) {
    %c0_i32 = arith.constant 0 : i32
    %c0_i32_0 = arith.constant 0 : i32
    %c0_i32_1 = arith.constant 0 : i32
    return %c0_i32, %c0_i32_0 : i32, i32
  }
  func.func @transform_7(%arg0: i32, %arg1: i32) -> (i32, i32, i32) {
    %c0_i32 = arith.constant 0 : i32
    %c0_i32_0 = arith.constant 0 : i32
    %c0_i32_1 = arith.constant 0 : i32
    return %arg0, %c0_i32, %c0_i32_0 : i32, i32, i32
  }
}

</mosaic_0001>

<llo_original>
// kernel: tpu_custom_call.1
$region0: #{tpu_custom_call.1}
  #allocation0 [shape = 'u32[]', space=smem, size = 0x4, offset = 0x4, fixed_abs, tag = 'smem constant byte address 0x4 - core index']
  #allocation1 [shape = 'u32[144,128]{1,0:T(1,128)}', space=vmem, size = 0x12000, scoped, tag = 'internal scratch']
  #allocation2 [shape = 'f32[1,32]{1,0:T(1,128)}', space=vmem, size = 0x200, scoped, tag = 'scratch operand']
  #allocation3 [shape = 'f32[1,32]{1,0:T(1,128)}', space=vmem, size = 0x200, scoped, tag = 'scratch operand']
  %s0 = inlined_call_operand.vmem [shape: f32[2,32,256], index: 0, kind: input, shape index: {}]
  %s1 = inlined_call_operand.vmem [shape: f32[32,128], index: 1, kind: input, shape index: {}]
  %s2 = inlined_call_operand.vmem [shape: f32[1,128], index: 2, kind: input, shape index: {}]
  %s3 = inlined_call_operand.vmem [shape: f32[128,32], index: 3, kind: input, shape index: {}]
  %s4 = inlined_call_operand.vmem [shape: f32[1,32], index: 4, kind: input, shape index: {}]
  %s5 = inlined_call_operand.vmem [shape: f32[1,32], index: 5, kind: input, shape index: {}]
  %s6 = inlined_call_operand.vmem [shape: f32[1,32], index: 6, kind: input, shape index: {}]
  %s7 = inlined_call_operand.hbm [shape: f32[2,1,32], index: 7, kind: output, shape index: {}]
  %s8 = sld [smem:[#allocation0]]
  $region69: #{tpu_custom_call.1} parent=0
    _
  %s10 = ssub.s32 1, %s8
  %s11 = scalar_select 0, %s10, %s8
  $region1: #{tpu_custom_call.1} parent=0
    #allocation4 [shape = 'u8[1024]{0}', space=vmem, size = 0x400, scoped, tag = 'output window, operand 0']
    #allocation5 [shape = 's32[2]{0}', space=sflag, size = 0x8, scoped, tag = 'scoped memory for tpu_custom_call.1']
    %12 = vsyncpa [#allocation5], 0
    %s13 = scalar_lea.sflag [#allocation5], 1
    %14 = vsyncpa %s13, 0
    loop: start=0, step=1, limit=4
    $region2: #{tpu_custom_call.1} parent=1 // loop_pre_header
      _
    $region3: #{tpu_custom_call.1} parent=1 // loop_header
      %s16 = sphi 0, %s20
      %p17 = scmp.ge.s32.totalorder %s16, 4
      %s23 = sphi 0, %s35
      %s24 = sphi 0, %s31
      %s25 = sphi 0, %s23
      %s26 = sphi 0, %s24
      %s27 = sphi 0, %s25
      %s28 = sphi 0, %s26
      %s40 = sphi 0, %s42
      %s43 = sphi 0, %s40
      %s44 = sphi 0, %s43
      %s60 = sphi 0, %s44
      %s64 = sphi 0, %s64
      %s66 = sphi 0, %s64
      %s67 = sphi 0, %s66
      %s81 = sphi 0, %s67
      %s85 = sphi 0, %s85
      %s87 = sphi 0, %s85
      %s88 = sphi 0, %s87
      %s102 = sphi 0, %s88
      %s106 = sphi 0, %s106
      %s108 = sphi 0, %s106
      %s109 = sphi 0, %s108
      %s123 = sphi 0, %s109
      %s127 = sphi 0, %s127
      %s129 = sphi 0, %s127
      %s130 = sphi 0, %s129
      %s144 = sphi 0, %s130
      %s148 = sphi 0, %s148
      %s150 = sphi 0, %s148
      %s151 = sphi 0, %s150
      %s165 = sphi 0, %s151
      %s169 = sphi 0, %s169
      %s171 = sphi 0, %s169
      %s172 = sphi 0, %s171
      %s186 = sphi 0, %s172
      %s192 = sphi 0, %s194
      %s195 = sphi 0, %s192
      %s196 = sphi 0, %s195
      %s212 = sphi 0, %s196
    $region4: #{tpu_custom_call.1} parent=1 // loop_header_branch
      %19 = sbr.rel (%p17) target = $region8
    $region5: #{tpu_custom_call.1} parent=1 // loop_body
      %s21 = ssub.s32 %s16, 1
      %s22 = ssub.s32 %s16, 2
      %s29 = sadd.s32 1, %s24
      %p30 = scmp.ge.s32.totalorder %s29, 1
      %s31 = scalar_select %p30, 0, %s29
      %s32 = sadd.s32 1, %s23
      %s33 = scalar_select %p30, %s32, %s23
      %p34 = scmp.ge.s32.totalorder %s33, 2
      %s35 = scalar_select %p34, 0, %s33
      %s36 = ssub.s32 %s23, %s35
      %s37 = ssub.s32 %s24, %s31
      %s38 = sor.u32 %s36, %s37
      %p39 = scmp.eq.s32.totalorder %s38, 0
      %s41 = sadd.s32 %s40, 1
      %s42 = scalar_select %p39, %s40, %s41
      %p45 = pneg %p39
      %p46 = scmp.eq.s32.totalorder %s16, 1
      %p47 = por %p45, %p46
      %p48 = scmp.ne.s32.totalorder %s40, %s43
      %p49 = scmp.eq.s32.totalorder %s16, 0
      %p50 = por %p48, %p49
      %p51 = scmp.ne.s32.totalorder %s40, %s43
      %p52 = scmp.eq.s32.totalorder %s21, 1
      %p53 = por %p51, %p52
      %p54 = scmp.ne.s32.totalorder %s43, %s44
      %p55 = scmp.eq.s32.totalorder %s21, 0
      %p56 = por %p54, %p55
      %p57 = scmp.ne.s32.totalorder %s43, %s44
      %p58 = scmp.eq.s32.totalorder %s22, 1
      %p59 = por %p57, %p58
      %p61 = scmp.ne.s32.totalorder %s44, %s60
      %p62 = scmp.eq.s32.totalorder %s22, 0
      %p63 = por %p61, %p62
      %s65 = sadd.s32 %s64, 1
      %p68 = scmp.eq.s32.totalorder %s16, 1
      %p69 = scmp.ne.s32.totalorder %s64, %s66
      %p70 = scmp.eq.s32.totalorder %s16, 0
      %p71 = por %p69, %p70
      %p72 = scmp.ne.s32.totalorder %s64, %s66
      %p73 = scmp.eq.s32.totalorder %s21, 1
      %p74 = por %p72, %p73
      %p75 = scmp.ne.s32.totalorder %s66, %s67
      %p76 = scmp.eq.s32.totalorder %s21, 0
      %p77 = por %p75, %p76
      %p78 = scmp.ne.s32.totalorder %s66, %s67
      %p79 = scmp.eq.s32.totalorder %s22, 1
      %p80 = por %p78, %p79
      %p82 = scmp.ne.s32.totalorder %s67, %s81
      %p83 = scmp.eq.s32.totalorder %s22, 0
      %p84 = por %p82, %p83
      %s86 = sadd.s32 %s85, 1
      %p89 = scmp.eq.s32.totalorder %s16, 1
      %p90 = scmp.ne.s32.totalorder %s85, %s87
      %p91 = scmp.eq.s32.totalorder %s16, 0
      %p92 = por %p90, %p91
      %p93 = scmp.ne.s32.totalorder %s85, %s87
      %p94 = scmp.eq.s32.totalorder %s21, 1
      %p95 = por %p93, %p94
      %p96 = scmp.ne.s32.totalorder %s87, %s88
      %p97 = scmp.eq.s32.totalorder %s21, 0
      %p98 = por %p96, %p97
      %p99 = scmp.ne.s32.totalorder %s87, %s88
      %p100 = scmp.eq.s32.totalorder %s22, 1
      %p101 = por %p99, %p100
      %p103 = scmp.ne.s32.totalorder %s88, %s102
      %p104 = scmp.eq.s32.totalorder %s22, 0
      %p105 = por %p103, %p104
      %s107 = sadd.s32 %s106, 1
      %p110 = scmp.eq.s32.totalorder %s16, 1
      %p111 = scmp.ne.s32.totalorder %s106, %s108
      %p112 = scmp.eq.s32.totalorder %s16, 0
      %p113 = por %p111, %p112
      %p114 = scmp.ne.s32.totalorder %s106, %s108
      %p115 = scmp.eq.s32.totalorder %s21, 1
      %p116 = por %p114, %p115
      %p117 = scmp.ne.s32.totalorder %s108, %s109
      %p118 = scmp.eq.s32.totalorder %s21, 0
      %p119 = por %p117, %p118
      %p120 = scmp.ne.s32.totalorder %s108, %s109
      %p121 = scmp.eq.s32.totalorder %s22, 1
      %p122 = por %p120, %p121
      %p124 = scmp.ne.s32.totalorder %s109, %s123
      %p125 = scmp.eq.s32.totalorder %s22, 0
      %p126 = por %p124, %p125
      %s128 = sadd.s32 %s127, 1
      %p131 = scmp.eq.s32.totalorder %s16, 1
      %p132 = scmp.ne.s32.totalorder %s127, %s129
      %p133 = scmp.eq.s32.totalorder %s16, 0
      %p134 = por %p132, %p133
      %p135 = scmp.ne.s32.totalorder %s127, %s129
      %p136 = scmp.eq.s32.totalorder %s21, 1
      %p137 = por %p135, %p136
      %p138 = scmp.ne.s32.totalorder %s129, %s130
      %p139 = scmp.eq.s32.totalorder %s21, 0
      %p140 = por %p138, %p139
      %p141 = scmp.ne.s32.totalorder %s129, %s130
      %p142 = scmp.eq.s32.totalorder %s22, 1
      %p143 = por %p141, %p142
      %p145 = scmp.ne.s32.totalorder %s130, %s144
      %p146 = scmp.eq.s32.totalorder %s22, 0
      %p147 = por %p145, %p146
      %s149 = sadd.s32 %s148, 1
      %p152 = scmp.eq.s32.totalorder %s16, 1
      %p153 = scmp.ne.s32.totalorder %s148, %s150
      %p154 = scmp.eq.s32.totalorder %s16, 0
      %p155 = por %p153, %p154
      %p156 = scmp.ne.s32.totalorder %s148, %s150
      %p157 = scmp.eq.s32.totalorder %s21, 1
      %p158 = por %p156, %p157
      %p159 = scmp.ne.s32.totalorder %s150, %s151
      %p160 = scmp.eq.s32.totalorder %s21, 0
      %p161 = por %p159, %p160
      %p162 = scmp.ne.s32.totalorder %s150, %s151
      %p163 = scmp.eq.s32.totalorder %s22, 1
      %p164 = por %p162, %p163
      %p166 = scmp.ne.s32.totalorder %s151, %s165
      %p167 = scmp.eq.s32.totalorder %s22, 0
      %p168 = por %p166, %p167
      %s170 = sadd.s32 %s169, 1
      %p173 = scmp.eq.s32.totalorder %s16, 1
      %p174 = scmp.ne.s32.totalorder %s169, %s171
      %p175 = scmp.eq.s32.totalorder %s16, 0
      %p176 = por %p174, %p175
      %p177 = scmp.ne.s32.totalorder %s169, %s171
      %p178 = scmp.eq.s32.totalorder %s21, 1
      %p179 = por %p177, %p178
      %p180 = scmp.ne.s32.totalorder %s171, %s172
      %p181 = scmp.eq.s32.totalorder %s21, 0
      %p182 = por %p180, %p181
      %p183 = scmp.ne.s32.totalorder %s171, %s172
      %p184 = scmp.eq.s32.totalorder %s22, 1
      %p185 = por %p183, %p184
      %p187 = scmp.ne.s32.totalorder %s172, %s186
      %p188 = scmp.eq.s32.totalorder %s22, 0
      %p189 = por %p187, %p188
      %s190 = ssub.s32 %s23, %s35
      %p191 = scmp.eq.s32.totalorder %s190, 0
      %s193 = sadd.s32 %s192, 1
      %s194 = scalar_select %p191, %s192, %s193
      %p197 = pneg %p191
      %p198 = scmp.eq.s32.totalorder %s16, 1
      %p199 = por %p197, %p198
      %p200 = scmp.ne.s32.totalorder %s192, %s195
      %p201 = scmp.eq.s32.totalorder %s16, 0
      %p202 = por %p200, %p201
      %p203 = scmp.ne.s32.totalorder %s192, %s195
      %p204 = scmp.eq.s32.totalorder %s21, 1
      %p205 = por %p203, %p204
      %p206 = scmp.ne.s32.totalorder %s195, %s196
      %p207 = scmp.eq.s32.totalorder %s21, 0
      %p208 = por %p206, %p207
      %p209 = scmp.ne.s32.totalorder %s195, %s196
      %p210 = scmp.eq.s32.totalorder %s22, 1
      %p211 = por %p209, %p210
      %p213 = scmp.ne.s32.totalorder %s196, %s212
      %p214 = scmp.eq.s32.totalorder %s22, 0
      %p215 = por %p213, %p214
      %p216 = scmp.le.s32.totalorder 1, %s16
      %p217 = scmp.lt.s32.totalorder %s16, 3
      %p218 = pnand %p216, %p217
      %p219 = pneg %p218
      // Predicated region
      $region9: #{tpu_custom_call.1} parent=5 // pred_check
        _
      $region10: #{tpu_custom_call.1} parent=5 // pred_check_branch
        %221 = sbr.rel (%p218) target = $region12
      $region11: #{tpu_custom_call.1} parent=5 // pred_region
        %s222 = ssub.s32 %s16, 1
        // Predicated region
        $region13: #{tpu_custom_call.1} parent=11 // pred_check
          %p223 = pneg %p77
        $region14: #{tpu_custom_call.1} parent=11 // pred_check_branch
          %225 = sbr.rel (%p223) target = $region16
        $region15: #{tpu_custom_call.1} parent=11 // pred_region
          _
        $region16: #{tpu_custom_call.1} parent=11 // pred_fallthru
          _
        // Predicated region
        $region17: #{tpu_custom_call.1} parent=11 // pred_check
          %p226 = pneg %p98
        $region18: #{tpu_custom_call.1} parent=11 // pred_check_branch
          %228 = sbr.rel (%p226) target = $region20
        $region19: #{tpu_custom_call.1} parent=11 // pred_region
          _
        $region20: #{tpu_custom_call.1} parent=11 // pred_fallthru
          _
        // Predicated region
        $region21: #{tpu_custom_call.1} parent=11 // pred_check
          %p229 = pneg %p119
        $region22: #{tpu_custom_call.1} parent=11 // pred_check_branch
          %231 = sbr.rel (%p229) target = $region24
        $region23: #{tpu_custom_call.1} parent=11 // pred_region
          _
        $region24: #{tpu_custom_call.1} parent=11 // pred_fallthru
          _
        // Predicated region
        $region25: #{tpu_custom_call.1} parent=11 // pred_check
          %p232 = pneg %p140
        $region26: #{tpu_custom_call.1} parent=11 // pred_check_branch
          %234 = sbr.rel (%p232) target = $region28
        $region27: #{tpu_custom_call.1} parent=11 // pred_region
          _
        $region28: #{tpu_custom_call.1} parent=11 // pred_fallthru
          _
        // Predicated region
        $region29: #{tpu_custom_call.1} parent=11 // pred_check
          %p235 = pneg %p161
        $region30: #{tpu_custom_call.1} parent=11 // pred_check_branch
          %237 = sbr.rel (%p235) target = $region32
        $region31: #{tpu_custom_call.1} parent=11 // pred_region
          _
        $region32: #{tpu_custom_call.1} parent=11 // pred_fallthru
          _
        // Predicated region
        $region33: #{tpu_custom_call.1} parent=11 // pred_check
          %p238 = pneg %p182
        $region34: #{tpu_custom_call.1} parent=11 // pred_check_branch
          %240 = sbr.rel (%p238) target = $region36
        $region35: #{tpu_custom_call.1} parent=11 // pred_region
          _
        $region36: #{tpu_custom_call.1} parent=11 // pred_fallthru
          _
      $region12: #{tpu_custom_call.1} parent=5 // pred_fallthru
        _
      %p241 = scmp.lt.s32.totalorder %s16, 2
      // Predicated region
      $region37: #{tpu_custom_call.1} parent=5 // pred_check
        %p242 = pneg %p241
      $region38: #{tpu_custom_call.1} parent=5 // pred_check_branch
        %244 = sbr.rel (%p242) target = $region40
      $region39: #{tpu_custom_call.1} parent=5 // pred_region
        // Predicated region
        $region41: #{tpu_custom_call.1} parent=39 // pred_check
          %p245 = pneg %p50
        $region42: #{tpu_custom_call.1} parent=39 // pred_check_branch
          %247 = sbr.rel (%p245) target = $region44
        $region43: #{tpu_custom_call.1} parent=39 // pred_region
          %s248 = smul.u32 2, %s24
          %p249 = scmp.lt.s32.totalorder %s23, 1
          %s250 = scalar_select %p249, %s23, 1
          %p251 = scmp.lt.s32.totalorder %s248, 1
          %s252 = scalar_select %p251, %s248, 1
          %s253 = smul.addr %s250, 8
          %s254 = sadd.s32 %s252, %s253
          %s255 = smul.addr %s254, 8
          %s256 = scalar_lea.vmem %s0, %s255
          %s257 = smul.u32 2, %s24
        $region44: #{tpu_custom_call.1} parent=39 // pred_fallthru
          _
      $region40: #{tpu_custom_call.1} parent=5 // pred_fallthru
        _
      %p258 = scmp.le.s32.totalorder 1, %s16
      %p259 = scmp.lt.s32.totalorder %s16, 3
      %p260 = pnand %p258, %p259
      %p261 = pneg %p260
      // Predicated region
      $region45: #{tpu_custom_call.1} parent=5 // pred_check
        _
      $region46: #{tpu_custom_call.1} parent=5 // pred_check_branch
        %263 = sbr.rel (%p260) target = $region48
      $region47: #{tpu_custom_call.1} parent=5 // pred_region
        %s264 = ssub.s32 %s16, 1
        %s265 = smul.u32 2, %s26
        %p266 = scmp.lt.s32.totalorder %s25, 1
        %s267 = scalar_select %p266, %s25, 1
        %p268 = scmp.lt.s32.totalorder %s265, 1
        %s269 = scalar_select %p268, %s265, 1
        %s270 = smul.addr %s267, 8
        %s271 = sadd.s32 %s269, %s270
        %s272 = smul.addr %s271, 8
        %s273 = scalar_lea.vmem %s0, %s272
        %p274 = pneg %p56
        %p275 = pneg %p53
        %p276 = pneg %p77
        %p277 = pneg %p74
        %p278 = pneg %p98
        %p279 = pneg %p95
        %p280 = pneg %p119
        %p281 = pneg %p116
        %p282 = pneg %p140
        %p283 = pneg %p137
        %p284 = pneg %p161
        %p285 = pneg %p158
        %p286 = pneg %p182
        %p287 = pneg %p179
        %p288 = pneg %p208
        %p289 = pneg %p205
        %s290 = sand.u32 %s195, 1
        %s291 = scalar_lea.sflag [#allocation5], %s290
        %s292 = sand.u32 %s195, 1
        %s293 = scalar_lea.vmem [#allocation4], %s292
        %s294 = smul.u32 2, %s26
        %p295 = scmp.lt.s32.totalorder %s25, 1
        %s296 = scalar_select %p295, %s25, 1
        %p297 = scmp.lt.s32.totalorder %s294, 1
        %s298 = scalar_select %p297, %s294, 1
        %s299 = smul.addr %s296, 8
        %s300 = sadd.s32 %s298, %s299
        %s301 = smul.addr %s300, 8
        %s302 = scalar_lea.vmem %s0, %s301
        %s303 = smul.u32 2, %s26
        %p304 = scmp.eq.s32.totalorder %s26, 0
        // Predicated region
        $region49: #{tpu_custom_call.1} parent=47 // pred_check
          %p305 = pneg %p304
        $region50: #{tpu_custom_call.1} parent=47 // pred_check_branch
          %307 = sbr.rel (%p305) target = $region52
        $region51: #{tpu_custom_call.1} parent=47 // pred_region
          %vm308 = vcmask 253952
          %309 = vst.msk [vmem:[#allocation2] sm:$0x1] %vm308, 0.0
          %310 = vst.msk [vmem:[#allocation3] sm:$0x1] %vm308, -inf
        $region52: #{tpu_custom_call.1} parent=47 // pred_fallthru
          _
        %v311 = vld [vmem:[%s302] sm:$0xff]
        %v312 = vld [vmem:[%s302 + $0x8] sm:$0xff]
        %v313 = vld [vmem:[%s302 + $0x10] sm:$0xff]
        %v314 = vld [vmem:[%s302 + $0x18] sm:$0xff]
        %v315 = vld [vmem:[%s302 + $0x20] sm:$0xff]
        %v316 = vld [vmem:[%s302 + $0x28] sm:$0xff]
        %v317 = vld [vmem:[%s302 + $0x30] sm:$0xff]
        %v318 = vld [vmem:[%s302 + $0x38] sm:$0xff]
        %v319 = vld [vmem:[#allocation2] sm:$0x1]
        %v320 = vadd.f32 %v311, %v312
        %321 = vadd.xlane.f32.xlu0 %v320
        %v322 = vpop.xlane.xlu0 %321
        %v323 = vadd.f32 %v313, %v314
        %324 = vadd.xlane.f32.xlu0 %v323
        %v325 = vpop.xlane.xlu0 %324
        %v326 = vadd.f32 %v315, %v316
        %327 = vadd.xlane.f32.xlu0 %v326
        %v328 = vpop.xlane.xlu0 %327
        %v329 = vadd.f32 %v317, %v318
        %330 = vadd.xlane.f32.xlu0 %v329
        %v331 = vpop.xlane.xlu0 %330
        %v336 = vlaneseq
        %v337 = vshrl.u32 %v336, 7
        %v338 = vsub.s32 0, %v337
        %v339 = vrot.slane %v322, %v338
        %v340 = vlaneseq
        %v341 = vshrl.u32 %v340, 7
        %v342 = vsub.s32 1, %v341
        %v343 = vrot.slane %v322, %v342
        %v344 = vlaneseq
        %v345 = vshrl.u32 %v344, 7
        %v346 = vsub.s32 2, %v345
        %v347 = vrot.slane %v322, %v346
        %v348 = vlaneseq
        %v349 = vshrl.u32 %v348, 7
        %v350 = vsub.s32 3, %v349
        %v351 = vrot.slane %v322, %v350
        %v352 = vlaneseq
        %v353 = vshrl.u32 %v352, 7
        %v354 = vsub.s32 4, %v353
        %v355 = vrot.slane %v322, %v354
        %v356 = vlaneseq
        %v357 = vshrl.u32 %v356, 7
        %v358 = vsub.s32 5, %v357
        %v359 = vrot.slane %v322, %v358
        %v360 = vlaneseq
        %v361 = vshrl.u32 %v360, 7
        %v362 = vsub.s32 6, %v361
        %v363 = vrot.slane %v322, %v362
        %v364 = vlaneseq
        %v365 = vshrl.u32 %v364, 7
        %v366 = vsub.s32 7, %v365
        %v367 = vrot.slane %v322, %v366
        %v368 = vlaneseq
        %v369 = vshrl.u32 %v368, 7
        %v370 = vsub.s32 0, %v369
        %v371 = vrot.slane %v325, %v370
        %v372 = vlaneseq
        %v373 = vshrl.u32 %v372, 7
        %v374 = vsub.s32 1, %v373
        %v375 = vrot.slane %v325, %v374
        %v376 = vlaneseq
        %v377 = vshrl.u32 %v376, 7
        %v378 = vsub.s32 2, %v377
        %v379 = vrot.slane %v325, %v378
        %v380 = vlaneseq
        %v381 = vshrl.u32 %v380, 7
        %v382 = vsub.s32 3, %v381
        %v383 = vrot.slane %v325, %v382
        %v384 = vlaneseq
        %v385 = vshrl.u32 %v384, 7
        %v386 = vsub.s32 4, %v385
        %v387 = vrot.slane %v325, %v386
        %v388 = vlaneseq
        %v389 = vshrl.u32 %v388, 7
        %v390 = vsub.s32 5, %v389
        %v391 = vrot.slane %v325, %v390
        %v392 = vlaneseq
        %v393 = vshrl.u32 %v392, 7
        %v394 = vsub.s32 6, %v393
        %v395 = vrot.slane %v325, %v394
        %v396 = vlaneseq
        %v397 = vshrl.u32 %v396, 7
        %v398 = vsub.s32 7, %v397
        %v399 = vrot.slane %v325, %v398
        %v400 = vlaneseq
        %v401 = vshrl.u32 %v400, 7
        %v402 = vsub.s32 0, %v401
        %v403 = vrot.slane %v328, %v402
        %v404 = vlaneseq
        %v405 = vshrl.u32 %v404, 7
        %v406 = vsub.s32 1, %v405
        %v407 = vrot.slane %v328, %v406
        %v408 = vlaneseq
        %v409 = vshrl.u32 %v408, 7
        %v410 = vsub.s32 2, %v409
        %v411 = vrot.slane %v328, %v410
        %v412 = vlaneseq
        %v413 = vshrl.u32 %v412, 7
        %v414 = vsub.s32 3, %v413
        %v415 = vrot.slane %v328, %v414
        %v416 = vlaneseq
        %v417 = vshrl.u32 %v416, 7
        %v418 = vsub.s32 4, %v417
        %v419 = vrot.slane %v328, %v418
        %v420 = vlaneseq
        %v421 = vshrl.u32 %v420, 7
        %v422 = vsub.s32 5, %v421
        %v423 = vrot.slane %v328, %v422
        %v424 = vlaneseq
        %v425 = vshrl.u32 %v424, 7
        %v426 = vsub.s32 6, %v425
        %v427 = vrot.slane %v328, %v426
        %v428 = vlaneseq
        %v429 = vshrl.u32 %v428, 7
        %v430 = vsub.s32 7, %v429
        %v431 = vrot.slane %v328, %v430
        %v432 = vlaneseq
        %v433 = vshrl.u32 %v432, 7
        %v434 = vsub.s32 0, %v433
        %v435 = vrot.slane %v331, %v434
        %v436 = vlaneseq
        %v437 = vshrl.u32 %v436, 7
        %v438 = vsub.s32 1, %v437
        %v439 = vrot.slane %v331, %v438
        %v440 = vlaneseq
        %v441 = vshrl.u32 %v440, 7
        %v442 = vsub.s32 2, %v441
        %v443 = vrot.slane %v331, %v442
        %v444 = vlaneseq
        %v445 = vshrl.u32 %v444, 7
        %v446 = vsub.s32 3, %v445
        %v447 = vrot.slane %v331, %v446
        %v448 = vlaneseq
        %v449 = vshrl.u32 %v448, 7
        %v450 = vsub.s32 4, %v449
        %v451 = vrot.slane %v331, %v450
        %v452 = vlaneseq
        %v453 = vshrl.u32 %v452, 7
        %v454 = vsub.s32 5, %v453
        %v455 = vrot.slane %v331, %v454
        %v456 = vlaneseq
        %v457 = vshrl.u32 %v456, 7
        %v458 = vsub.s32 6, %v457
        %v459 = vrot.slane %v331, %v458
        %v460 = vlaneseq
        %v461 = vshrl.u32 %v460, 7
        %v462 = vsub.s32 7, %v461
        %v463 = vrot.slane %v331, %v462
        %v464 = vcombine.low %v339, %v343
        %v465 = vcombine.low %v347, %v351
        %v466 = vcombine.low %v355, %v359
        %v467 = vcombine.low %v363, %v367
        %v469 = vunpack.c.l.s4 1966171168
        %v470 = vunpack.c.0.s8 %v469
        %v471 = vlaneseq
        %v472 = vshrl.u32 %v471, 7
        %v473 = vsub.s32 %v470, %v472
        %v474 = vrot.slane %v464, %v473
        %v476 = vunpack.c.l.s4 1966171168
        %v477 = vunpack.c.0.s8 %v476
        %v478 = vlaneseq
        %v479 = vshrl.u32 %v478, 7
        %v480 = vsub.s32 %v477, %v479
        %v481 = vrot.slane %v465, %v480
        %v483 = vunpack.c.l.s4 1966171168
        %v484 = vunpack.c.0.s8 %v483
        %v485 = vlaneseq
        %v486 = vshrl.u32 %v485, 7
        %v487 = vsub.s32 %v484, %v486
        %v488 = vrot.slane %v466, %v487
        %v490 = vunpack.c.l.s4 1966171168
        %v491 = vunpack.c.0.s8 %v490
        %v492 = vlaneseq
        %v493 = vshrl.u32 %v492, 7
        %v494 = vsub.s32 %v491, %v493
        %v495 = vrot.slane %v467, %v494
        %v496 = vcombine.low %v474, %v481
        %v497 = vcombine.low %v488, %v495
        %v499 = vunpack.c.l.s4 1966171168
        %v500 = vunpack.c.0.s8 %v499
        %v501 = vlaneseq
        %v502 = vshrl.u32 %v501, 7
        %v503 = vsub.s32 %v500, %v502
        %v504 = vrot.slane %v496, %v503
        %v506 = vunpack.c.l.s4 1966171168
        %v507 = vunpack.c.0.s8 %v506
        %v508 = vlaneseq
        %v509 = vshrl.u32 %v508, 7
        %v510 = vsub.s32 %v507, %v509
        %v511 = vrot.slane %v497, %v510
        %v512 = vcombine.low %v504, %v511
        %v513 = vcombine.low %v371, %v375
        %v514 = vcombine.low %v379, %v383
        %v515 = vcombine.low %v387, %v391
        %v516 = vcombine.low %v395, %v399
        %v518 = vunpack.c.l.s4 1966171168
        %v519 = vunpack.c.0.s8 %v518
        %v520 = vlaneseq
        %v521 = vshrl.u32 %v520, 7
        %v522 = vsub.s32 %v519, %v521
        %v523 = vrot.slane %v513, %v522
        %v525 = vunpack.c.l.s4 1966171168
        %v526 = vunpack.c.0.s8 %v525
        %v527 = vlaneseq
        %v528 = vshrl.u32 %v527, 7
        %v529 = vsub.s32 %v526, %v528
        %v530 = vrot.slane %v514, %v529
        %v532 = vunpack.c.l.s4 1966171168
        %v533 = vunpack.c.0.s8 %v532
        %v534 = vlaneseq
        %v535 = vshrl.u32 %v534, 7
        %v536 = vsub.s32 %v533, %v535
        %v537 = vrot.slane %v515, %v536
        %v539 = vunpack.c.l.s4 1966171168
        %v540 = vunpack.c.0.s8 %v539
        %v541 = vlaneseq
        %v542 = vshrl.u32 %v541, 7
        %v543 = vsub.s32 %v540, %v542
        %v544 = vrot.slane %v516, %v543
        %v545 = vcombine.low %v523, %v530
        %v546 = vcombine.low %v537, %v544
        %v548 = vunpack.c.l.s4 1966171168
        %v549 = vunpack.c.0.s8 %v548
        %v550 = vlaneseq
        %v551 = vshrl.u32 %v550, 7
        %v552 = vsub.s32 %v549, %v551
        %v553 = vrot.slane %v545, %v552
        %v555 = vunpack.c.l.s4 1966171168
        %v556 = vunpack.c.0.s8 %v555
        %v557 = vlaneseq
        %v558 = vshrl.u32 %v557, 7
        %v559 = vsub.s32 %v556, %v558
        %v560 = vrot.slane %v546, %v559
        %v561 = vcombine.low %v553, %v560
        %v562 = vcombine.low %v403, %v407
        %v563 = vcombine.low %v411, %v415
        %v564 = vcombine.low %v419, %v423
        %v565 = vcombine.low %v427, %v431
        %v567 = vunpack.c.l.s4 1966171168
        %v568 = vunpack.c.0.s8 %v567
        %v569 = vlaneseq
        %v570 = vshrl.u32 %v569, 7
        %v571 = vsub.s32 %v568, %v570
        %v572 = vrot.slane %v562, %v571
        %v574 = vunpack.c.l.s4 1966171168
        %v575 = vunpack.c.0.s8 %v574
        %v576 = vlaneseq
        %v577 = vshrl.u32 %v576, 7
        %v578 = vsub.s32 %v575, %v577
        %v579 = vrot.slane %v563, %v578
        %v581 = vunpack.c.l.s4 1966171168
        %v582 = vunpack.c.0.s8 %v581
        %v583 = vlaneseq
        %v584 = vshrl.u32 %v583, 7
        %v585 = vsub.s32 %v582, %v584
        %v586 = vrot.slane %v564, %v585
        %v588 = vunpack.c.l.s4 1966171168
        %v589 = vunpack.c.0.s8 %v588
        %v590 = vlaneseq
        %v591 = vshrl.u32 %v590, 7
        %v592 = vsub.s32 %v589, %v591
        %v593 = vrot.slane %v565, %v592
        %v594 = vcombine.low %v572, %v579
        %v595 = vcombine.low %v586, %v593
        %v597 = vunpack.c.l.s4 1966171168
        %v598 = vunpack.c.0.s8 %v597
        %v599 = vlaneseq
        %v600 = vshrl.u32 %v599, 7
        %v601 = vsub.s32 %v598, %v600
        %v602 = vrot.slane %v594, %v601
        %v604 = vunpack.c.l.s4 1966171168
        %v605 = vunpack.c.0.s8 %v604
        %v606 = vlaneseq
        %v607 = vshrl.u32 %v606, 7
        %v608 = vsub.s32 %v605, %v607
        %v609 = vrot.slane %v595, %v608
        %v610 = vcombine.low %v602, %v609
        %v611 = vcombine.low %v435, %v439
        %v612 = vcombine.low %v443, %v447
        %v613 = vcombine.low %v451, %v455
        %v614 = vcombine.low %v459, %v463
        %v616 = vunpack.c.l.s4 1966171168
        %v617 = vunpack.c.0.s8 %v616
        %v618 = vlaneseq
        %v619 = vshrl.u32 %v618, 7
        %v620 = vsub.s32 %v617, %v619
        %v621 = vrot.slane %v611, %v620
        %v623 = vunpack.c.l.s4 1966171168
        %v624 = vunpack.c.0.s8 %v623
        %v625 = vlaneseq
        %v626 = vshrl.u32 %v625, 7
        %v627 = vsub.s32 %v624, %v626
        %v628 = vrot.slane %v612, %v627
        %v630 = vunpack.c.l.s4 1966171168
        %v631 = vunpack.c.0.s8 %v630
        %v632 = vlaneseq
        %v633 = vshrl.u32 %v632, 7
        %v634 = vsub.s32 %v631, %v633
        %v635 = vrot.slane %v613, %v634
        %v637 = vunpack.c.l.s4 1966171168
        %v638 = vunpack.c.0.s8 %v637
        %v639 = vlaneseq
        %v640 = vshrl.u32 %v639, 7
        %v641 = vsub.s32 %v638, %v640
        %v642 = vrot.slane %v614, %v641
        %v643 = vcombine.low %v621, %v628
        %v644 = vcombine.low %v635, %v642
        %v646 = vunpack.c.l.s4 1966171168
        %v647 = vunpack.c.0.s8 %v646
        %v648 = vlaneseq
        %v649 = vshrl.u32 %v648, 7
        %v650 = vsub.s32 %v647, %v649
        %v651 = vrot.slane %v643, %v650
        %v653 = vunpack.c.l.s4 1966171168
        %v654 = vunpack.c.0.s8 %v653
        %v655 = vlaneseq
        %v656 = vshrl.u32 %v655, 7
        %v657 = vsub.s32 %v654, %v656
        %v658 = vrot.slane %v644, %v657
        %v659 = vcombine.low %v651, %v658
        %660 = vset.pattern.permute.xlu0 0
        %661 = vperm.xlu0 %660, %v512
        %v662 = vpop.permute.xlu0 %661
        %663 = vset.pattern.permute.xlu0 0
        %664 = vperm.xlu0 %663, %v561
        %v665 = vpop.permute.xlu0 %664
        %666 = vset.pattern.permute.xlu0 0
        %667 = vperm.xlu0 %666, %v610
        %v668 = vpop.permute.xlu0 %667
        %669 = vset.pattern.permute.xlu0 0
        %670 = vperm.xlu0 %669, %v659
        %v671 = vpop.permute.xlu0 %670
        %v672 = vlaneseq
        %v673 = vand.u32 %v672, 127
        %v674 = vlaneseq
        %v675 = vshrl.u32 %v674, 7
        %v676 = vsub.s32 %v673, %v675
        %v677 = vrot.slane %v662, %v676
        %v678 = vadd.s32 %v673, 4294967288
        %v679 = vlaneseq
        %v680 = vshrl.u32 %v679, 7
        %v681 = vsub.s32 %v678, %v680
        %v682 = vrot.slane %v665, %v681
        %vm683 = vcmask 130112
        %v684 = vsel %vm683, %v682, %v677
        %v685 = vadd.s32 %v673, 4294967280
        %v686 = vlaneseq
        %v687 = vshrl.u32 %v686, 7
        %v688 = vsub.s32 %v685, %v687
        %v689 = vrot.slane %v668, %v688
        %vm690 = vcmask 195712
        %v691 = vsel %vm690, %v689, %v684
        %v692 = vadd.s32 %v673, 4294967272
        %v693 = vlaneseq
        %v694 = vshrl.u32 %v693, 7
        %v695 = vsub.s32 %v692, %v694
        %v696 = vrot.slane %v671, %v695
        %vm697 = vcmask 261312
        %v698 = vsel %vm697, %v696, %v691
        %v700 = vunpack.c.l.s4 1966171168
        %v701 = vunpack.c.0.s8 %v700
        %v702 = vlaneseq
        %v703 = vshrl.u32 %v702, 7
        %v704 = vsub.s32 %v701, %v703
        %v705 = vrot.slane %v698, %v704
        %v707 = vunpack.c.l.s4 1966171168
        %v708 = vunpack.c.0.s8 %v707
        %v709 = vlaneseq
        %v710 = vshrl.u32 %v709, 7
        %v711 = vsub.s32 %v708, %v710
        %v712 = vrot.slane %v705, %v711
        %v714 = vadd.f32 %v319, %v712
        %vm715 = vcmask 253952
        %716 = vst.msk [vmem:[#allocation2] sm:$0x1] %vm715, %v714
        %v717 = vld [vmem:[#allocation3] sm:$0x1]
        %v718 = vmax.f32 %v311, %v312
        %719 = vmax.xlane.f32.xlu0 %v718
        %v720 = vpop.xlane.xlu0 %719
        %v721 = vmax.f32 %v313, %v314
        %722 = vmax.xlane.f32.xlu0 %v721
        %v723 = vpop.xlane.xlu0 %722
        %v724 = vmax.f32 %v315, %v316
        %725 = vmax.xlane.f32.xlu0 %v724
        %v726 = vpop.xlane.xlu0 %725
        %v727 = vmax.f32 %v317, %v318
        %728 = vmax.xlane.f32.xlu0 %v727
        %v729 = vpop.xlane.xlu0 %728
        %v734 = vlaneseq
        %v735 = vshrl.u32 %v734, 7
        %v736 = vsub.s32 0, %v735
        %v737 = vrot.slane %v720, %v736
        %v738 = vlaneseq
        %v739 = vshrl.u32 %v738, 7
        %v740 = vsub.s32 1, %v739
        %v741 = vrot.slane %v720, %v740
        %v742 = vlaneseq
        %v743 = vshrl.u32 %v742, 7
        %v744 = vsub.s32 2, %v743
        %v745 = vrot.slane %v720, %v744
        %v746 = vlaneseq
        %v747 = vshrl.u32 %v746, 7
        %v748 = vsub.s32 3, %v747
        %v749 = vrot.slane %v720, %v748
        %v750 = vlaneseq
        %v751 = vshrl.u32 %v750, 7
        %v752 = vsub.s32 4, %v751
        %v753 = vrot.slane %v720, %v752
        %v754 = vlaneseq
        %v755 = vshrl.u32 %v754, 7
        %v756 = vsub.s32 5, %v755
        %v757 = vrot.slane %v720, %v756
        %v758 = vlaneseq
        %v759 = vshrl.u32 %v758, 7
        %v760 = vsub.s32 6, %v759
        %v761 = vrot.slane %v720, %v760
        %v762 = vlaneseq
        %v763 = vshrl.u32 %v762, 7
        %v764 = vsub.s32 7, %v763
        %v765 = vrot.slane %v720, %v764
        %v766 = vlaneseq
        %v767 = vshrl.u32 %v766, 7
        %v768 = vsub.s32 0, %v767
        %v769 = vrot.slane %v723, %v768
        %v770 = vlaneseq
        %v771 = vshrl.u32 %v770, 7
        %v772 = vsub.s32 1, %v771
        %v773 = vrot.slane %v723, %v772
        %v774 = vlaneseq
        %v775 = vshrl.u32 %v774, 7
        %v776 = vsub.s32 2, %v775
        %v777 = vrot.slane %v723, %v776
        %v778 = vlaneseq
        %v779 = vshrl.u32 %v778, 7
        %v780 = vsub.s32 3, %v779
        %v781 = vrot.slane %v723, %v780
        %v782 = vlaneseq
        %v783 = vshrl.u32 %v782, 7
        %v784 = vsub.s32 4, %v783
        %v785 = vrot.slane %v723, %v784
        %v786 = vlaneseq
        %v787 = vshrl.u32 %v786, 7
        %v788 = vsub.s32 5, %v787
        %v789 = vrot.slane %v723, %v788
        %v790 = vlaneseq
        %v791 = vshrl.u32 %v790, 7
        %v792 = vsub.s32 6, %v791
        %v793 = vrot.slane %v723, %v792
        %v794 = vlaneseq
        %v795 = vshrl.u32 %v794, 7
        %v796 = vsub.s32 7, %v795
        %v797 = vrot.slane %v723, %v796
        %v798 = vlaneseq
        %v799 = vshrl.u32 %v798, 7
        %v800 = vsub.s32 0, %v799
        %v801 = vrot.slane %v726, %v800
        %v802 = vlaneseq
        %v803 = vshrl.u32 %v802, 7
        %v804 = vsub.s32 1, %v803
        %v805 = vrot.slane %v726, %v804
        %v806 = vlaneseq
        %v807 = vshrl.u32 %v806, 7
        %v808 = vsub.s32 2, %v807
        %v809 = vrot.slane %v726, %v808
        %v810 = vlaneseq
        %v811 = vshrl.u32 %v810, 7
        %v812 = vsub.s32 3, %v811
        %v813 = vrot.slane %v726, %v812
        %v814 = vlaneseq
        %v815 = vshrl.u32 %v814, 7
        %v816 = vsub.s32 4, %v815
        %v817 = vrot.slane %v726, %v816
        %v818 = vlaneseq
        %v819 = vshrl.u32 %v818, 7
        %v820 = vsub.s32 5, %v819
        %v821 = vrot.slane %v726, %v820
        %v822 = vlaneseq
        %v823 = vshrl.u32 %v822, 7
        %v824 = vsub.s32 6, %v823
        %v825 = vrot.slane %v726, %v824
        %v826 = vlaneseq
        %v827 = vshrl.u32 %v826, 7
        %v828 = vsub.s32 7, %v827
        %v829 = vrot.slane %v726, %v828
        %v830 = vlaneseq
        %v831 = vshrl.u32 %v830, 7
        %v832 = vsub.s32 0, %v831
        %v833 = vrot.slane %v729, %v832
        %v834 = vlaneseq
        %v835 = vshrl.u32 %v834, 7
        %v836 = vsub.s32 1, %v835
        %v837 = vrot.slane %v729, %v836
        %v838 = vlaneseq
        %v839 = vshrl.u32 %v838, 7
        %v840 = vsub.s32 2, %v839
        %v841 = vrot.slane %v729, %v840
        %v842 = vlaneseq
        %v843 = vshrl.u32 %v842, 7
        %v844 = vsub.s32 3, %v843
        %v845 = vrot.slane %v729, %v844
        %v846 = vlaneseq
        %v847 = vshrl.u32 %v846, 7
        %v848 = vsub.s32 4, %v847
        %v849 = vrot.slane %v729, %v848
        %v850 = vlaneseq
        %v851 = vshrl.u32 %v850, 7
        %v852 = vsub.s32 5, %v851
        %v853 = vrot.slane %v729, %v852
        %v854 = vlaneseq
        %v855 = vshrl.u32 %v854, 7
        %v856 = vsub.s32 6, %v855
        %v857 = vrot.slane %v729, %v856
        %v858 = vlaneseq
        %v859 = vshrl.u32 %v858, 7
        %v860 = vsub.s32 7, %v859
        %v861 = vrot.slane %v729, %v860
        %v862 = vcombine.low %v737, %v741
        %v863 = vcombine.low %v745, %v749
        %v864 = vcombine.low %v753, %v757
        %v865 = vcombine.low %v761, %v765
        %v867 = vunpack.c.l.s4 1966171168
        %v868 = vunpack.c.0.s8 %v867
        %v869 = vlaneseq
        %v870 = vshrl.u32 %v869, 7
        %v871 = vsub.s32 %v868, %v870
        %v872 = vrot.slane %v862, %v871
        %v874 = vunpack.c.l.s4 1966171168
        %v875 = vunpack.c.0.s8 %v874
        %v876 = vlaneseq
        %v877 = vshrl.u32 %v876, 7
        %v878 = vsub.s32 %v875, %v877
        %v879 = vrot.slane %v863, %v878
        %v881 = vunpack.c.l.s4 1966171168
        %v882 = vunpack.c.0.s8 %v881
        %v883 = vlaneseq
        %v884 = vshrl.u32 %v883, 7
        %v885 = vsub.s32 %v882, %v884
        %v886 = vrot.slane %v864, %v885
        %v888 = vunpack.c.l.s4 1966171168
        %v889 = vunpack.c.0.s8 %v888
        %v890 = vlaneseq
        %v891 = vshrl.u32 %v890, 7
        %v892 = vsub.s32 %v889, %v891
        %v893 = vrot.slane %v865, %v892
        %v894 = vcombine.low %v872, %v879
        %v895 = vcombine.low %v886, %v893
        %v897 = vunpack.c.l.s4 1966171168
        %v898 = vunpack.c.0.s8 %v897
        %v899 = vlaneseq
        %v900 = vshrl.u32 %v899, 7
        %v901 = vsub.s32 %v898, %v900
        %v902 = vrot.slane %v894, %v901
        %v904 = vunpack.c.l.s4 1966171168
        %v905 = vunpack.c.0.s8 %v904
        %v906 = vlaneseq
        %v907 = vshrl.u32 %v906, 7
        %v908 = vsub.s32 %v905, %v907
        %v909 = vrot.slane %v895, %v908
        %v910 = vcombine.low %v902, %v909
        %v911 = vcombine.low %v769, %v773
        %v912 = vcombine.low %v777, %v781
        %v913 = vcombine.low %v785, %v789
        %v914 = vcombine.low %v793, %v797
        %v916 = vunpack.c.l.s4 1966171168
        %v917 = vunpack.c.0.s8 %v916
        %v918 = vlaneseq
        %v919 = vshrl.u32 %v918, 7
        %v920 = vsub.s32 %v917, %v919
        %v921 = vrot.slane %v911, %v920
        %v923 = vunpack.c.l.s4 1966171168
        %v924 = vunpack.c.0.s8 %v923
        %v925 = vlaneseq
        %v926 = vshrl.u32 %v925, 7
        %v927 = vsub.s32 %v924, %v926
        %v928 = vrot.slane %v912, %v927
        %v930 = vunpack.c.l.s4 1966171168
        %v931 = vunpack.c.0.s8 %v930
        %v932 = vlaneseq
        %v933 = vshrl.u32 %v932, 7
        %v934 = vsub.s32 %v931, %v933
        %v935 = vrot.slane %v913, %v934
        %v937 = vunpack.c.l.s4 1966171168
        %v938 = vunpack.c.0.s8 %v937
        %v939 = vlaneseq
        %v940 = vshrl.u32 %v939, 7
        %v941 = vsub.s32 %v938, %v940
        %v942 = vrot.slane %v914, %v941
        %v943 = vcombine.low %v921, %v928
        %v944 = vcombine.low %v935, %v942
        %v946 = vunpack.c.l.s4 1966171168
        %v947 = vunpack.c.0.s8 %v946
        %v948 = vlaneseq
        %v949 = vshrl.u32 %v948, 7
        %v950 = vsub.s32 %v947, %v949
        %v951 = vrot.slane %v943, %v950
        %v953 = vunpack.c.l.s4 1966171168
        %v954 = vunpack.c.0.s8 %v953
        %v955 = vlaneseq
        %v956 = vshrl.u32 %v955, 7
        %v957 = vsub.s32 %v954, %v956
        %v958 = vrot.slane %v944, %v957
        %v959 = vcombine.low %v951, %v958
        %v960 = vcombine.low %v801, %v805
        %v961 = vcombine.low %v809, %v813
        %v962 = vcombine.low %v817, %v821
        %v963 = vcombine.low %v825, %v829
        %v965 = vunpack.c.l.s4 1966171168
        %v966 = vunpack.c.0.s8 %v965
        %v967 = vlaneseq
        %v968 = vshrl.u32 %v967, 7
        %v969 = vsub.s32 %v966, %v968
        %v970 = vrot.slane %v960, %v969
        %v972 = vunpack.c.l.s4 1966171168
        %v973 = vunpack.c.0.s8 %v972
        %v974 = vlaneseq
        %v975 = vshrl.u32 %v974, 7
        %v976 = vsub.s32 %v973, %v975
        %v977 = vrot.slane %v961, %v976
        %v979 = vunpack.c.l.s4 1966171168
        %v980 = vunpack.c.0.s8 %v979
        %v981 = vlaneseq
        %v982 = vshrl.u32 %v981, 7
        %v983 = vsub.s32 %v980, %v982
        %v984 = vrot.slane %v962, %v983
        %v986 = vunpack.c.l.s4 1966171168
        %v987 = vunpack.c.0.s8 %v986
        %v988 = vlaneseq
        %v989 = vshrl.u32 %v988, 7
        %v990 = vsub.s32 %v987, %v989
        %v991 = vrot.slane %v963, %v990
        %v992 = vcombine.low %v970, %v977
        %v993 = vcombine.low %v984, %v991
        %v995 = vunpack.c.l.s4 1966171168
        %v996 = vunpack.c.0.s8 %v995
        %v997 = vlaneseq
        %v998 = vshrl.u32 %v997, 7
        %v999 = vsub.s32 %v996, %v998
        %v1000 = vrot.slane %v992, %v999
        %v1002 = vunpack.c.l.s4 1966171168
        %v1003 = vunpack.c.0.s8 %v1002
        %v1004 = vlaneseq
        %v1005 = vshrl.u32 %v1004, 7
        %v1006 = vsub.s32 %v1003, %v1005
        %v1007 = vrot.slane %v993, %v1006
        %v1008 = vcombine.low %v1000, %v1007
        %v1009 = vcombine.low %v833, %v837
        %v1010 = vcombine.low %v841, %v845
        %v1011 = vcombine.low %v849, %v853
        %v1012 = vcombine.low %v857, %v861
        %v1014 = vunpack.c.l.s4 1966171168
        %v1015 = vunpack.c.0.s8 %v1014
        %v1016 = vlaneseq
        %v1017 = vshrl.u32 %v1016, 7
        %v1018 = vsub.s32 %v1015, %v1017
        %v1019 = vrot.slane %v1009, %v1018
        %v1021 = vunpack.c.l.s4 1966171168
        %v1022 = vunpack.c.0.s8 %v1021
        %v1023 = vlaneseq
        %v1024 = vshrl.u32 %v1023, 7
        %v1025 = vsub.s32 %v1022, %v1024
        %v1026 = vrot.slane %v1010, %v1025
        %v1028 = vunpack.c.l.s4 1966171168
        %v1029 = vunpack.c.0.s8 %v1028
        %v1030 = vlaneseq
        %v1031 = vshrl.u32 %v1030, 7
        %v1032 = vsub.s32 %v1029, %v1031
        %v1033 = vrot.slane %v1011, %v1032
        %v1035 = vunpack.c.l.s4 1966171168
        %v1036 = vunpack.c.0.s8 %v1035
        %v1037 = vlaneseq
        %v1038 = vshrl.u32 %v1037, 7
        %v1039 = vsub.s32 %v1036, %v1038
        %v1040 = vrot.slane %v1012, %v1039
        %v1041 = vcombine.low %v1019, %v1026
        %v1042 = vcombine.low %v1033, %v1040
        %v1044 = vunpack.c.l.s4 1966171168
        %v1045 = vunpack.c.0.s8 %v1044
        %v1046 = vlaneseq
        %v1047 = vshrl.u32 %v1046, 7
        %v1048 = vsub.s32 %v1045, %v1047
        %v1049 = vrot.slane %v1041, %v1048
        %v1051 = vunpack.c.l.s4 1966171168
        %v1052 = vunpack.c.0.s8 %v1051
        %v1053 = vlaneseq
        %v1054 = vshrl.u32 %v1053, 7
        %v1055 = vsub.s32 %v1052, %v1054
        %v1056 = vrot.slane %v1042, %v1055
        %v1057 = vcombine.low %v1049, %v1056
        %1058 = vset.pattern.permute.xlu0 0
        %1059 = vperm.xlu0 %1058, %v910
        %v1060 = vpop.permute.xlu0 %1059
        %1061 = vset.pattern.permute.xlu0 0
        %1062 = vperm.xlu0 %1061, %v959
        %v1063 = vpop.permute.xlu0 %1062
        %1064 = vset.pattern.permute.xlu0 0
        %1065 = vperm.xlu0 %1064, %v1008
        %v1066 = vpop.permute.xlu0 %1065
        %1067 = vset.pattern.permute.xlu0 0
        %1068 = vperm.xlu0 %1067, %v1057
        %v1069 = vpop.permute.xlu0 %1068
        %v1070 = vlaneseq
        %v1071 = vshrl.u32 %v1070, 7
        %v1072 = vsub.s32 %v673, %v1071
        %v1073 = vrot.slane %v1060, %v1072
        %v1074 = vlaneseq
        %v1075 = vshrl.u32 %v1074, 7
        %v1076 = vsub.s32 %v678, %v1075
        %v1077 = vrot.slane %v1063, %v1076
        %v1078 = vsel %vm683, %v1077, %v1073
        %v1079 = vlaneseq
        %v1080 = vshrl.u32 %v1079, 7
        %v1081 = vsub.s32 %v685, %v1080
        %v1082 = vrot.slane %v1066, %v1081
        %v1083 = vsel %vm690, %v1082, %v1078
        %v1084 = vlaneseq
        %v1085 = vshrl.u32 %v1084, 7
        %v1086 = vsub.s32 %v692, %v1085
        %v1087 = vrot.slane %v1069, %v1086
        %v1088 = vsel %vm697, %v1087, %v1083
        %v1090 = vunpack.c.l.s4 1966171168
        %v1091 = vunpack.c.0.s8 %v1090
        %v1092 = vlaneseq
        %v1093 = vshrl.u32 %v1092, 7
        %v1094 = vsub.s32 %v1091, %v1093
        %v1095 = vrot.slane %v1088, %v1094
        %v1097 = vunpack.c.l.s4 1966171168
        %v1098 = vunpack.c.0.s8 %v1097
        %v1099 = vlaneseq
        %v1100 = vshrl.u32 %v1099, 7
        %v1101 = vsub.s32 %v1098, %v1100
        %v1102 = vrot.slane %v1095, %v1101
        %v1104 = vmax.f32 %v717, %v1102
        %1105 = vst.msk [vmem:[#allocation3] sm:$0x1] %vm715, %v1104
        // Predicated region
        $region53: #{tpu_custom_call.1} parent=47 // pred_check
          %p1106 = pneg %p304
        $region54: #{tpu_custom_call.1} parent=47 // pred_check_branch
          %1108 = sbr.rel (%p1106) target = $region56
        $region55: #{tpu_custom_call.1} parent=47 // pred_region
          %v1109 = vld [vmem:[#allocation2] sm:$0x1]
          %v1110 = vmul.f32 %v1109, 0.00390625
          %v1111 = vld [vmem:[#allocation3] sm:$0x1]
          %v1112 = vld [vmem:[%s1] sm:$0xff]
          %v1113 = vld [vmem:[%s1 + $0x8] sm:$0xff]
          %v1114 = vld [vmem:[%s1 + $0x10] sm:$0xff]
          %v1115 = vld [vmem:[%s1 + $0x18] sm:$0xff]
          %v1116 = vld [vmem:[%s2] sm:$0x1]
          %vm1117 = vcmask 261120
          %v1119 = vsel %vm1117, %v1110, 0
          %1121 = vmatprep.subr.mxu0 0.0
          %1122 = vmatpush1.msra.mxu0 %v1112
          %1123 = vmatprep.subr.mxu0 0.0
          %1124 = vmatpush1.msra.mxu0 %v1113
          %1125 = vmatprep.subr.mxu0 0.0
          %1126 = vmatpush1.msra.mxu0 %v1114
          %1127 = vmatprep.subr.mxu0 0.0
          %1128 = vmatpush1.msra.mxu0 %v1115
          %1129 = vmatprep.subr.mxu0 0.0
          %1130 = vmatpush1.msra.mxu0 0.0
          %1131 = vmatprep.subr.mxu0 0.0
          %1132 = vmatpush1.msra.mxu0 0.0
          %1133 = vmatprep.subr.mxu0 0.0
          %1134 = vmatpush1.msra.mxu0 0.0
          %1135 = vmatprep.subr.mxu0 0.0
          %1136 = vmatpush1.msra.mxu0 0.0
          %1137 = vmatprep.subr.mxu0 0.0
          %1138 = vmatpush1.msra.mxu0 0.0
          %1139 = vmatprep.subr.mxu0 0.0
          %1140 = vmatpush1.msra.mxu0 0.0
          %1141 = vmatprep.subr.mxu0 0.0
          %1142 = vmatpush1.msra.mxu0 0.0
          %1143 = vmatprep.subr.mxu0 0.0
          %1144 = vmatpush1.msra.mxu0 0.0
          %1145 = vmatprep.subr.mxu0 0.0
          %1146 = vmatpush1.msra.mxu0 0.0
          %1147 = vmatprep.subr.mxu0 0.0
          %1148 = vmatpush1.msra.mxu0 0.0
          %1149 = vmatprep.subr.mxu0 0.0
          %1150 = vmatpush1.msra.mxu0 0.0
          %1151 = vmatprep.subr.mxu0 0.0
          %1152 = vmatpush1.msra.mxu0 0.0
          %1153 = vmatprep.subr.mxu0 0.0
          %1154 = vmatpush1.msra.mxu0 0.0
          %1155 = vmatprep.subr.mxu0 0.0
          %1156 = vmatpush1.msra.mxu0 0.0
          %1157 = vmatprep.subr.mxu0 0.0
          %1158 = vmatpush1.msra.mxu0 0.0
          %1159 = vmatprep.subr.mxu0 0.0
          %1160 = vmatpush1.msra.mxu0 0.0
          %1161 = vmatprep.subr.mxu0 0.0
          %1162 = vmatpush1.msra.mxu0 0.0
          %1163 = vmatprep.subr.mxu0 0.0
          %1164 = vmatpush1.msra.mxu0 0.0
          %1165 = vmatprep.subr.mxu0 0.0
          %1166 = vmatpush1.msra.mxu0 0.0
          %1167 = vmatprep.subr.mxu0 0.0
          %1168 = vmatpush1.msra.mxu0 0.0
          %1169 = vmatprep.subr.mxu0 0.0
          %1170 = vmatpush1.msra.mxu0 0.0
          %1171 = vmatprep.subr.mxu0 0.0
          %1172 = vmatpush1.msra.mxu0 0.0
          %1173 = vmatprep.subr.mxu0 0.0
          %1174 = vmatpush1.msra.mxu0 0.0
          %1175 = vmatprep.subr.mxu0 0.0
          %1176 = vmatpush1.msra.mxu0 0.0
          %1177 = vmatprep.subr.mxu0 0.0
          %1178 = vmatpush1.msra.mxu0 0.0
          %1179 = vmatprep.subr.mxu0 0.0
          %1180 = vmatpush1.msra.mxu0 0.0
          %1181 = vmatprep.subr.mxu0 0.0
          %1182 = vmatpush1.msra.mxu0 0.0
          %1183 = vmatprep.subr.mxu0 0.0
          %1184 = vmatpush1.msra.mxu0 0.0
          %1185 = vmatprep.mubr.f32.mxu0 0.0
          %1186 = vmatmul.mubr.f32.gmra.mrb[0].mxu0 %v1119
          %v1187 = vpop.f32.mrb[0].mxu0
          %v1188 = vadd.f32 %v1116, %v1187
          %v1189 = vpop.f32.mrb[0].mxu0
          %1190 = vdwg.mxu0
          %v1191 = vmax.f32 %v1188, 0.0
          %v1193 = vsel %vm1117, %v1111, 0
          %1195 = vmatprep.subr.mxu0 0.0
          %1196 = vmatpush1.msra.mxu0 %v1112
          %1197 = vmatprep.subr.mxu0 0.0
          %1198 = vmatpush1.msra.mxu0 %v1113
          %1199 = vmatprep.subr.mxu0 0.0
          %1200 = vmatpush1.msra.mxu0 %v1114
          %1201 = vmatprep.subr.mxu0 0.0
          %1202 = vmatpush1.msra.mxu0 %v1115
          %1203 = vmatprep.subr.mxu0 0.0
          %1204 = vmatpush1.msra.mxu0 0.0
          %1205 = vmatprep.subr.mxu0 0.0
          %1206 = vmatpush1.msra.mxu0 0.0
          %1207 = vmatprep.subr.mxu0 0.0
          %1208 = vmatpush1.msra.mxu0 0.0
          %1209 = vmatprep.subr.mxu0 0.0
          %1210 = vmatpush1.msra.mxu0 0.0
          %1211 = vmatprep.subr.mxu0 0.0
          %1212 = vmatpush1.msra.mxu0 0.0
          %1213 = vmatprep.subr.mxu0 0.0
          %1214 = vmatpush1.msra.mxu0 0.0
          %1215 = vmatprep.subr.mxu0 0.0
          %1216 = vmatpush1.msra.mxu0 0.0
          %1217 = vmatprep.subr.mxu0 0.0
          %1218 = vmatpush1.msra.mxu0 0.0
          %1219 = vmatprep.subr.mxu0 0.0
          %1220 = vmatpush1.msra.mxu0 0.0
          %1221 = vmatprep.subr.mxu0 0.0
          %1222 = vmatpush1.msra.mxu0 0.0
          %1223 = vmatprep.subr.mxu0 0.0
          %1224 = vmatpush1.msra.mxu0 0.0
          %1225 = vmatprep.subr.mxu0 0.0
          %1226 = vmatpush1.msra.mxu0 0.0
          %1227 = vmatprep.subr.mxu0 0.0
          %1228 = vmatpush1.msra.mxu0 0.0
          %1229 = vmatprep.subr.mxu0 0.0
          %1230 = vmatpush1.msra.mxu0 0.0
          %1231 = vmatprep.subr.mxu0 0.0
          %1232 = vmatpush1.msra.mxu0 0.0
          %1233 = vmatprep.subr.mxu0 0.0
          %1234 = vmatpush1.msra.mxu0 0.0
          %1235 = vmatprep.subr.mxu0 0.0
          %1236 = vmatpush1.msra.mxu0 0.0
          %1237 = vmatprep.subr.mxu0 0.0
          %1238 = vmatpush1.msra.mxu0 0.0
          %1239 = vmatprep.subr.mxu0 0.0
          %1240 = vmatpush1.msra.mxu0 0.0
          %1241 = vmatprep.subr.mxu0 0.0
          %1242 = vmatpush1.msra.mxu0 0.0
          %1243 = vmatprep.subr.mxu0 0.0
          %1244 = vmatpush1.msra.mxu0 0.0
          %1245 = vmatprep.subr.mxu0 0.0
          %1246 = vmatpush1.msra.mxu0 0.0
          %1247 = vmatprep.subr.mxu0 0.0
          %1248 = vmatpush1.msra.mxu0 0.0
          %1249 = vmatprep.subr.mxu0 0.0
          %1250 = vmatpush1.msra.mxu0 0.0
          %1251 = vmatprep.subr.mxu0 0.0
          %1252 = vmatpush1.msra.mxu0 0.0
          %1253 = vmatprep.subr.mxu0 0.0
          %1254 = vmatpush1.msra.mxu0 0.0
          %1255 = vmatprep.subr.mxu0 0.0
          %1256 = vmatpush1.msra.mxu0 0.0
          %1257 = vmatprep.subr.mxu0 0.0
          %1258 = vmatpush1.msra.mxu0 0.0
          %1259 = vmatprep.mubr.f32.mxu0 0.0
          %1260 = vmatmul.mubr.f32.gmra.mrb[0].mxu0 %v1193
          %v1261 = vpop.f32.mrb[0].mxu0
          %v1262 = vadd.f32 %v1116, %v1261
          %v1263 = vpop.f32.mrb[0].mxu0
          %1264 = vdwg.mxu0
          %v1265 = vmax.f32 %v1262, 0.0
          %v1266 = vadd.f32 %v1191, %v1265
          %v1267 = vld [vmem:[%s3] sm:$0xff]
          %v1268 = vld [vmem:[%s3 + $0x8] sm:$0xff]
          %v1269 = vld [vmem:[%s3 + $0x10] sm:$0xff]
          %v1270 = vld [vmem:[%s3 + $0x18] sm:$0xff]
          %v1271 = vld [vmem:[%s3 + $0x20] sm:$0xff]
          %v1272 = vld [vmem:[%s3 + $0x28] sm:$0xff]
          %v1273 = vld [vmem:[%s3 + $0x30] sm:$0xff]
          %v1274 = vld [vmem:[%s3 + $0x38] sm:$0xff]
          %v1275 = vld [vmem:[%s3 + $0x40] sm:$0xff]
          %v1276 = vld [vmem:[%s3 + $0x48] sm:$0xff]
          %v1277 = vld [vmem:[%s3 + $0x50] sm:$0xff]
          %v1278 = vld [vmem:[%s3 + $0x58] sm:$0xff]
          %v1279 = vld [vmem:[%s3 + $0x60] sm:$0xff]
          %v1280 = vld [vmem:[%s3 + $0x68] sm:$0xff]
          %v1281 = vld [vmem:[%s3 + $0x70] sm:$0xff]
          %v1282 = vld [vmem:[%s3 + $0x78] sm:$0xff]
          %v1283 = vld [vmem:[%s4] sm:$0x1]
          %v1284 = vmul.f32 %v1283, 2.0
          %1285 = vmatprep.subr.mxu0 0.0
          %1286 = vmatpush1.msra.mxu0 %v1267
          %1287 = vmatprep.subr.mxu0 0.0
          %1288 = vmatpush1.msra.mxu0 %v1268
          %1289 = vmatprep.subr.mxu0 0.0
          %1290 = vmatpush1.msra.mxu0 %v1269
          %1291 = vmatprep.subr.mxu0 0.0
          %1292 = vmatpush1.msra.mxu0 %v1270
          %1293 = vmatprep.subr.mxu0 0.0
          %1294 = vmatpush1.msra.mxu0 %v1271
          %1295 = vmatprep.subr.mxu0 0.0
          %1296 = vmatpush1.msra.mxu0 %v1272
          %1297 = vmatprep.subr.mxu0 0.0
          %1298 = vmatpush1.msra.mxu0 %v1273
          %1299 = vmatprep.subr.mxu0 0.0
          %1300 = vmatpush1.msra.mxu0 %v1274
          %1301 = vmatprep.subr.mxu0 0.0
          %1302 = vmatpush1.msra.mxu0 %v1275
          %1303 = vmatprep.subr.mxu0 0.0
          %1304 = vmatpush1.msra.mxu0 %v1276
          %1305 = vmatprep.subr.mxu0 0.0
          %1306 = vmatpush1.msra.mxu0 %v1277
          %1307 = vmatprep.subr.mxu0 0.0
          %1308 = vmatpush1.msra.mxu0 %v1278
          %1309 = vmatprep.subr.mxu0 0.0
          %1310 = vmatpush1.msra.mxu0 %v1279
          %1311 = vmatprep.subr.mxu0 0.0
          %1312 = vmatpush1.msra.mxu0 %v1280
          %1313 = vmatprep.subr.mxu0 0.0
          %1314 = vmatpush1.msra.mxu0 %v1281
          %1315 = vmatprep.subr.mxu0 0.0
          %1316 = vmatpush1.msra.mxu0 %v1282
          %1317 = vmatprep.subr.mxu0 0.0
          %1318 = vmatpush1.msra.mxu0 0.0
          %1319 = vmatprep.subr.mxu0 0.0
          %1320 = vmatpush1.msra.mxu0 0.0
          %1321 = vmatprep.subr.mxu0 0.0
          %1322 = vmatpush1.msra.mxu0 0.0
          %1323 = vmatprep.subr.mxu0 0.0
          %1324 = vmatpush1.msra.mxu0 0.0
          %1325 = vmatprep.subr.mxu0 0.0
          %1326 = vmatpush1.msra.mxu0 0.0
          %1327 = vmatprep.subr.mxu0 0.0
          %1328 = vmatpush1.msra.mxu0 0.0
          %1329 = vmatprep.subr.mxu0 0.0
          %1330 = vmatpush1.msra.mxu0 0.0
          %1331 = vmatprep.subr.mxu0 0.0
          %1332 = vmatpush1.msra.mxu0 0.0
          %1333 = vmatprep.subr.mxu0 0.0
          %1334 = vmatpush1.msra.mxu0 0.0
          %1335 = vmatprep.subr.mxu0 0.0
          %1336 = vmatpush1.msra.mxu0 0.0
          %1337 = vmatprep.subr.mxu0 0.0
          %1338 = vmatpush1.msra.mxu0 0.0
          %1339 = vmatprep.subr.mxu0 0.0
          %1340 = vmatpush1.msra.mxu0 0.0
          %1341 = vmatprep.subr.mxu0 0.0
          %1342 = vmatpush1.msra.mxu0 0.0
          %1343 = vmatprep.subr.mxu0 0.0
          %1344 = vmatpush1.msra.mxu0 0.0
          %1345 = vmatprep.subr.mxu0 0.0
          %1346 = vmatpush1.msra.mxu0 0.0
          %1347 = vmatprep.subr.mxu0 0.0
          %1348 = vmatpush1.msra.mxu0 0.0
          %1349 = vmatprep.mubr.f32.mxu0 0.0
          %1350 = vmatmul.mubr.f32.gmra.mrb[0].mxu0 %v1266
          %v1351 = vpop.f32.mrb[0].mxu0
          %v1352 = vadd.f32 %v1284, %v1351
          %v1353 = vpop.f32.mrb[0].mxu0
          %1354 = vdwg.mxu0
          %v1355 = vld [vmem:[%s5] sm:$0x1]
          %v1356 = vmul.f32 %v1352, %v1355
          %v1357 = vld [vmem:[%s6] sm:$0x1]
          %v1358 = vadd.f32 %v1356, %v1357
          %v1359 = vsub.f32 0.0, %v1358
          %v1360 = vmul.f32 %v1359, 1.442695
          %v1361 = vpow.pop %v1360
          %v1362 = vadd.f32 %v1361, 1.0
          %v1363 = vrcp.pop %v1362
          %1364 = vst.msk [vmem:[%s293] sm:$0x1] %vm715, %v1363
        $region56: #{tpu_custom_call.1} parent=47 // pred_fallthru
          _
        %s1365 = sand.u32 %s195, 1
        %s1366 = scalar_lea.sflag [#allocation5], %s1365
        %s1367 = sand.u32 %s195, 1
        %s1368 = scalar_lea.vmem [#allocation4], %s1367
        // Predicated region
        $region57: #{tpu_custom_call.1} parent=47 // pred_check
          %p1369 = pneg %p205
        $region58: #{tpu_custom_call.1} parent=47 // pred_check_branch
          %1371 = sbr.rel (%p1369) target = $region60
        $region59: #{tpu_custom_call.1} parent=47 // pred_region
          %s1373 = ssub.s32 16, 16
          %1374 = vsyncadd %s1366, %s1373
          %s1375 = smul.addr %s25, 16
          %s1376 = scalar_lea.hbm %s7, %s1375
          %s1378 = sshll.u32 %s1368, 4
          %s1379 = int_to_ptr.vmem [resolvable:$true] %s1378
          %1381 = dma.vmem_to_hbm [thread:$0]  %s1379, 16, %s1376, %s1366
        $region60: #{tpu_custom_call.1} parent=47 // pred_fallthru
          _
      $region48: #{tpu_custom_call.1} parent=5 // pred_fallthru
        _
      %p1382 = scmp.le.s32.totalorder 2, %s16
      // Predicated region
      $region61: #{tpu_custom_call.1} parent=5 // pred_check
        %p1383 = pneg %p1382
      $region62: #{tpu_custom_call.1} parent=5 // pred_check_branch
        %1385 = sbr.rel (%p1383) target = $region64
      $region63: #{tpu_custom_call.1} parent=5 // pred_region
        %s1386 = ssub.s32 %s16, 2
        // Predicated region
        $region65: #{tpu_custom_call.1} parent=63 // pred_check
          %p1387 = pneg %p211
        $region66: #{tpu_custom_call.1} parent=63 // pred_check_branch
          %1389 = sbr.rel (%p1387) target = $region68
        $region67: #{tpu_custom_call.1} parent=63 // pred_region
          %s1390 = sand.u32 %s196, 1
          %s1391 = scalar_lea.sflag [#allocation5], %s1390
          %s1392 = sand.u32 %s196, 1
          %s1393 = scalar_lea.vmem [#allocation4], %s1392
          %1394 = dma.done %s1391, 16
        $region68: #{tpu_custom_call.1} parent=63 // pred_fallthru
          _
      $region64: #{tpu_custom_call.1} parent=5 // pred_fallthru
        _
    $region6: #{tpu_custom_call.1} parent=1 // loop_footer
      %s20 = sadd.s32 1, %s16
    $region7: #{tpu_custom_call.1} parent=1 // loop_footer_branch
      %15 = sbr.rel target = $region3
    $region8: #{tpu_custom_call.1} parent=1 // loop_exit
      _
    %1395 = vsyncpa [#allocation5], 1
    %s1396 = scalar_lea.sflag [#allocation5], 1
    %1397 = vsyncpa %s1396, 1

</llo_original>
